<compile_context>
chip_gen: v7x
topology: tpu7x:2x2x1
jax: 0.10.0
libtpu: 0.0.40
codegen_flags: <defaults>
</compile_context>

<pallas_src>
import jax
import jax.numpy as jnp
from jax.experimental import pallas as pl
from jax.experimental.pallas import tpu as pltpu

_LANE = 128


def _round_up(x, m):
    return (x + m - 1) // m * m


def _softplus(x):
    # Numerically stable softplus: max(x, 0) + log1p(exp(-|x|))
    return jnp.maximum(x, 0.0) + jnp.log1p(jnp.exp(-jnp.abs(x)))


def _leaky_relu(x, negative_slope=0.01):
    return jnp.where(x > 0, x, negative_slope * x)


# ----------------------------------------------------------------------------
# Kernel
# ----------------------------------------------------------------------------
def gaussian_mlp_kernel(x_ref,
                        w1_ref, b1_ref,
                        w2_ref, b2_ref,
                        w3_ref, b3_ref,
                        maxlv_ref, minlv_ref,
                        mu_ref, logvar_ref):
    out_p = mu_ref.shape[1]                      # lane-padded output width
    x = x_ref[...]                               # (tb, in_p), bf16

    # Hidden layer 1: Linear (bf16 operands, f32 accumulate) + LeakyReLU (f32)
    h = jnp.dot(x, w1_ref[...], preferred_element_type=jnp.float32) + b1_ref[...]
    h = _leaky_relu(h).astype(w2_ref.dtype)

    # Hidden layer 2
    h = jnp.dot(h, w2_ref[...], preferred_element_type=jnp.float32) + b2_ref[...]
    h = _leaky_relu(h).astype(w3_ref.dtype)

    # Fused head: one (tb, 2*out_p) matmul; split on a vreg boundary (free).
    out = jnp.dot(h, w3_ref[...], preferred_element_type=jnp.float32) + b3_ref[...]
    mu = out[:, :out_p]
    lv = out[:, out_p:]

    max_logvar = maxlv_ref[...]                  # (1, out_p), broadcasts over tile
    min_logvar = minlv_ref[...]

    # Soft clamping of logvar, exactly as in the PyTorch module (f32).
    lv = max_logvar - _softplus(max_logvar - lv)
    lv = min_logvar + _softplus(lv - min_logvar)

    mu_ref[...] = mu
    logvar_ref[...] = lv


# ----------------------------------------------------------------------------
# One-time parameter preparation (padding / head split / dtype conversion)
# ----------------------------------------------------------------------------
def prepare_params(params, output_dim, *, compute_dtype=jnp.bfloat16):
    """Pad / split / cast GaussianMLP parameters once; reuse across calls."""
    w1, b1, w2, b2, w3, b3, max_logvar, min_logvar = params
    input_dim, h1 = w1.shape
    h2 = w2.shape[1]

    in_p = _round_up(input_dim, _LANE)
    h1_p = _round_up(h1, _LANE)
    h2_p = _round_up(h2, _LANE)
    out_p = _round_up(output_dim, _LANE)

    def pad2(a, rows, cols):
        return jnp.pad(a, ((0, rows - a.shape[0]), (0, cols - a.shape[1])))

    # Split the fused 2*output_dim head, pad each half to a 128-lane multiple,
    # then re-concatenate so the kernel does ONE head matmul and the in-kernel
    # mu/logvar split lands on a vreg boundary. Zero padding is exact:
    # LeakyReLU(0)=0 and zero weight rows contribute nothing; padded output
    # lanes are sliced off in the wrapper.
    w3_mu, w3_lv = w3[:, :output_dim], w3[:, output_dim:]
    b3_mu, b3_lv = b3[:, :output_dim], b3[:, output_dim:]
    w3p = jnp.concatenate([pad2(w3_mu, h2_p, out_p), pad2(w3_lv, h2_p, out_p)], axis=1)
    b3p = jnp.concatenate([pad2(b3_mu, 1, out_p), pad2(b3_lv, 1, out_p)], axis=1)

    return {
        "w1": pad2(w1, in_p, h1_p).astype(compute_dtype),
        "b1": pad2(b1, 1, h1_p).astype(jnp.float32),
        "w2": pad2(w2, h1_p, h2_p).astype(compute_dtype),
        "b2": pad2(b2, 1, h2_p).astype(jnp.float32),
        "w3": w3p.astype(compute_dtype),
        "b3": b3p.astype(jnp.float32),
        "max_logvar": pad2(max_logvar.reshape(1, output_dim), 1, out_p).astype(jnp.float32),
        "min_logvar": pad2(min_logvar.reshape(1, output_dim), 1, out_p).astype(jnp.float32),
        "dims": (input_dim, h1, h2, output_dim, in_p, h1_p, h2_p, out_p),
        "compute_dtype": compute_dtype,
    }


def _choose_batch_tile(batch_tile, in_p, h1_p, h2_p, out_p, weight_bytes, itemsize):
    """Largest multiple-of-8 batch tile that keeps VMEM well inside 64 MiB (v7x)."""
    # Per-row bytes: double-buffered x tile, double-buffered f32 mu/logvar tiles,
    # plus a rough estimate of live in-flight activations.
    row_bytes = (2 * itemsize * in_p                    # x tile (2 buffers)
                 + 2 * 2 * 4 * out_p                    # mu + logvar tiles (2 buffers)
                 + 4 * in_p + (4 + itemsize) * (h1_p + h2_p) + 12 * out_p)
    budget = (48 << 20) - weight_bytes                  # headroom under 64 MiB
    tb = min(batch_tile, max(8, budget // max(row_bytes, 1)))
    return max(8, (tb // 8) * 8)


# ----------------------------------------------------------------------------
# Forward wrapper
# ----------------------------------------------------------------------------
def gaussian_mlp_forward(x, prepared, *, batch_tile=512):
    """x: [B, input_dim]. Returns (mu, logvar), each [B, output_dim] float32."""
    input_dim, h1, h2, output_dim, in_p, h1_p, h2_p, out_p = prepared["dims"]
    compute_dtype = prepared["compute_dtype"]
    itemsize = jnp.dtype(compute_dtype).itemsize

    B = x.shape[0]
    assert x.shape[1] == input_dim

    weight_bytes = (itemsize * (in_p * h1_p + h1_p * h2_p + h2_p * 2 * out_p)
                    + 4 * (h1_p + h2_p + 2 * out_p + 2 * out_p))

    # Balanced batch tiles: bound tail-tile waste and give v7x's second
    # TensorCore work whenever the batch is big enough to split.
    tb_cap = _choose_batch_tile(batch_tile, in_p, h1_p, h2_p, out_p,
                                weight_bytes, itemsize)
    min_tiles = 2 if B >= 16 else 1
    n_tiles = max(pl.cdiv(B, tb_cap), min_tiles)
    tb = min(_round_up(pl.cdiv(B, n_tiles), 8), tb_cap)
    b_p = _round_up(B, tb)
    num_tiles = pl.cdiv(b_p, tb)

    # Only the input is padded per call (weights were prepared once).
    xp = jnp.pad(x, ((0, b_p - B), (0, in_p - input_dim))).astype(compute_dtype)

    def resident(shape):
        # Constant-index blocks stay pinned in VMEM; no double buffering.
        return pl.BlockSpec(shape, lambda i: (0, 0), pipeline_mode=pl.Buffered(1))

    def batch_block(cols):
        return pl.BlockSpec((tb, cols), lambda i: (i, 0))

    # VMEM budget: actual need plus generous headroom, capped at v7x physical.
    stream_bytes = 2 * tb * itemsize * in_p + 2 * 2 * tb * 4 * out_p
    act_bytes = tb * (4 * in_p + (4 + itemsize) * (h1_p + h2_p) + 12 * out_p)
    vmem_limit = min(max(32 << 20,
                         int(1.5 * (weight_bytes + stream_bytes + act_bytes)) + (8 << 20)),
                     64 << 20)

    cost = pl.CostEstimate(
        flops=2 * b_p * (in_p * h1_p + h1_p * h2_p + h2_p * 2 * out_p),
        transcendentals=4 * b_p * out_p,   # two stable softplus = exp + log1p each
        bytes_accessed=(itemsize * (b_p * in_p + in_p * h1_p + h1_p * h2_p
                                    + h2_p * 2 * out_p)
                        + 4 * (h1_p + h2_p + 2 * out_p + 2 * out_p)
                        + 4 * 2 * b_p * out_p),
    )

    mu_p, logvar_p = pl.pallas_call(
        gaussian_mlp_kernel,
        out_shape=(
            jax.ShapeDtypeStruct((b_p, out_p), jnp.float32),
            jax.ShapeDtypeStruct((b_p, out_p), jnp.float32),
        ),
        grid=(num_tiles,),
        in_specs=[
            batch_block(in_p),                       # x tile (streamed)
            resident((in_p, h1_p)), resident((1, h1_p)),
            resident((h1_p, h2_p)), resident((1, h2_p)),
            resident((h2_p, 2 * out_p)), resident((1, 2 * out_p)),
            resident((1, out_p)), resident((1, out_p)),
        ],
        out_specs=(batch_block(out_p), batch_block(out_p)),
        compiler_params=pltpu.CompilerParams(
            dimension_semantics=("parallel",),
            vmem_limit_bytes=vmem_limit),
        cost_estimate=cost,
    )(xp,
      prepared["w1"], prepared["b1"],
      prepared["w2"], prepared["b2"],
      prepared["w3"], prepared["b3"],
      prepared["max_logvar"], prepared["min_logvar"])

    return mu_p[:B, :output_dim], logvar_p[:B, :output_dim]


# ----------------------------------------------------------------------------
# Init + reference (pure JAX) for the self-check
# ----------------------------------------------------------------------------
def xavier_uniform(key, fan_in, fan_out):
    # torch.nn.init.xavier_uniform_ : U(-a, a), a = sqrt(6 / (fan_in + fan_out))
    a = jnp.sqrt(6.0 / (fan_in + fan_out))
    return jax.random.uniform(key, (fan_in, fan_out), jnp.float32, -a, a)


def init_params(key, input_dim, hidden_dims, output_dim):
    dims = [input_dim] + list(hidden_dims) + [output_dim * 2]
    keys = jax.random.split(key, len(dims) - 1)
    params = []
    for i in range(len(dims) - 1):
        w = xavier_uniform(keys[i], dims[i], dims[i + 1])
        b = jnp.full((1, dims[i + 1]), 0.01, jnp.float32)
        params.extend([w, b])
    max_logvar = jnp.full((output_dim,), 0.5, jnp.float32)
    min_logvar = jnp.full((output_dim,), -10.0, jnp.float32)
    params.extend([max_logvar, min_logvar])
    return tuple(params)


def reference_forward(x, params, output_dim):
    w1, b1, w2, b2, w3, b3, max_logvar, min_logvar = params
    h = x @ w1 + b1
    h = jnp.where(h > 0, h, 0.01 * h)
    h = h @ w2 + b2
    h = jnp.where(h > 0, h, 0.01 * h)
    out = h @ w3 + b3
    mu, logvar = out[:, :output_dim], out[:, output_dim:]
    logvar = max_logvar - jax.nn.softplus(max_logvar - logvar)
    logvar = min_logvar + jax.nn.softplus(logvar - min_logvar)
    return mu, logvar


if __name__ == "__main__":
    batch = 8
    input_dim = 32
    hidden_dims = (64, 64)
    output_dim = 16

    key = jax.random.PRNGKey(0)
    k_x, k_p = jax.random.split(key)

    x = jax.random.normal(k_x, (batch, input_dim), jnp.float32)
    params = init_params(k_p, input_dim, hidden_dims, output_dim)

    # One-time parameter preparation (padding, head fusion, bf16 cast).
    prepared = prepare_params(params, output_dim, compute_dtype=jnp.bfloat16)

    mu, logvar = gaussian_mlp_forward(x, prepared)
    mu, logvar = jax.block_until_ready((mu, logvar))

    mu_ref, logvar_ref = reference_forward(x, params, output_dim)
    assert mu.shape == (batch, output_dim) and logvar.shape == (batch, output_dim)
    # bf16 matmul operands with f32 accumulation -> relaxed tolerance.
    assert jnp.allclose(mu, mu_ref, atol=2e-2, rtol=2e-2)
    assert jnp.allclose(logvar, logvar_ref, atol=2e-2, rtol=2e-2)

    print("KERNEL_OK")
</pallas_src>

<mosaic_0001>
module attributes {stable_mosaic.version = 11 : i64} {
  func.func @gaussian_mlp_kernel(%arg0: i32, %arg1: memref<8x128xbf16, #tpu.memory_space<vmem>>, %arg2: memref<128x128xbf16, #tpu.memory_space<vmem>>, %arg3: memref<1x128xf32, #tpu.memory_space<vmem>>, %arg4: memref<128x128xbf16, #tpu.memory_space<vmem>>, %arg5: memref<1x128xf32, #tpu.memory_space<vmem>>, %arg6: memref<128x256xbf16, #tpu.memory_space<vmem>>, %arg7: memref<1x256xf32, #tpu.memory_space<vmem>>, %arg8: memref<1x128xf32, #tpu.memory_space<vmem>>, %arg9: memref<1x128xf32, #tpu.memory_space<vmem>>, %arg10: memref<8x128xf32, #tpu.memory_space<vmem>>, %arg11: memref<8x128xf32, #tpu.memory_space<vmem>>) attributes {dimension_semantics = [#tpu.dimension_semantics<parallel>], iteration_bounds = array<i64: 1>, scalar_prefetch = 0 : i64, scratch_operands = 0 : i64, tpu.core_type = #tpu.core_type<tc>, window_params = [{transform_indices = @transform_0, window_bounds = array<i64: 8, 128>}, {pipeline_mode = #tpu.pipeline_mode<synchronous>, transform_indices = @transform_1, window_bounds = array<i64: 128, 128>}, {pipeline_mode = #tpu.pipeline_mode<synchronous>, transform_indices = @transform_2, window_bounds = array<i64: 1, 128>}, {pipeline_mode = #tpu.pipeline_mode<synchronous>, transform_indices = @transform_3, window_bounds = array<i64: 128, 128>}, {pipeline_mode = #tpu.pipeline_mode<synchronous>, transform_indices = @transform_4, window_bounds = array<i64: 1, 128>}, {pipeline_mode = #tpu.pipeline_mode<synchronous>, transform_indices = @transform_5, window_bounds = array<i64: 128, 256>}, {pipeline_mode = #tpu.pipeline_mode<synchronous>, transform_indices = @transform_6, window_bounds = array<i64: 1, 256>}, {pipeline_mode = #tpu.pipeline_mode<synchronous>, transform_indices = @transform_7, window_bounds = array<i64: 1, 128>}, {pipeline_mode = #tpu.pipeline_mode<synchronous>, transform_indices = @transform_8, window_bounds = array<i64: 1, 128>}, {transform_indices = @transform_9, window_bounds = array<i64: 8, 128>}, {transform_indices = @transform_10, window_bounds = array<i64: 8, 128>}]} {
    %c0 = arith.constant 0 : index
    %c0_0 = arith.constant 0 : index
    %0 = vector.load %arg1[%c0, %c0_0] : memref<8x128xbf16, #tpu.memory_space<vmem>>, vector<8x128xbf16>
    %c0_1 = arith.constant 0 : index
    %c0_2 = arith.constant 0 : index
    %1 = vector.load %arg2[%c0_1, %c0_2] : memref<128x128xbf16, #tpu.memory_space<vmem>>, vector<128x128xbf16>
    %cst = arith.constant dense<0.000000e+00> : vector<8x128xf32>
    %2 = tpu.matmul %0, %1, %cst {dimension_numbers = #tpu.dot_dimension_numbers<[1], [0], [0], [1], [0, 0, 1, 1], [], []>} : vector<8x128xbf16>, vector<128x128xbf16>, vector<8x128xf32> -> vector<8x128xf32>
    %c0_3 = arith.constant 0 : index
    %c0_4 = arith.constant 0 : index
    %3 = vector.load %arg3[%c0_3, %c0_4] : memref<1x128xf32, #tpu.memory_space<vmem>>, vector<1x128xf32>
    %4 = vector.broadcast %3 : vector<1x128xf32> to vector<8x128xf32>
    %5 = arith.addf %2, %4 : vector<8x128xf32>
    %cst_5 = arith.constant 0.000000e+00 : f32
    %6 = vector.broadcast %cst_5 : f32 to vector<8x128xf32>
    %7 = arith.cmpf ogt, %5, %6 : vector<8x128xf32>
    %cst_6 = arith.constant 0.00999999977 : f32
    %8 = vector.broadcast %cst_6 : f32 to vector<8x128xf32>
    %9 = arith.mulf %8, %5 : vector<8x128xf32>
    %10 = arith.select %7, %5, %9 : vector<8x128xi1>, vector<8x128xf32>
    %11 = arith.truncf %10 : vector<8x128xf32> to vector<8x128xbf16>
    %c0_7 = arith.constant 0 : index
    %c0_8 = arith.constant 0 : index
    %12 = vector.load %arg4[%c0_7, %c0_8] : memref<128x128xbf16, #tpu.memory_space<vmem>>, vector<128x128xbf16>
    %cst_9 = arith.constant dense<0.000000e+00> : vector<8x128xf32>
    %13 = tpu.matmul %11, %12, %cst_9 {dimension_numbers = #tpu.dot_dimension_numbers<[1], [0], [0], [1], [0, 0, 1, 1], [], []>} : vector<8x128xbf16>, vector<128x128xbf16>, vector<8x128xf32> -> vector<8x128xf32>
    %c0_10 = arith.constant 0 : index
    %c0_11 = arith.constant 0 : index
    %14 = vector.load %arg5[%c0_10, %c0_11] : memref<1x128xf32, #tpu.memory_space<vmem>>, vector<1x128xf32>
    %15 = vector.broadcast %14 : vector<1x128xf32> to vector<8x128xf32>
    %16 = arith.addf %13, %15 : vector<8x128xf32>
    %cst_12 = arith.constant 0.000000e+00 : f32
    %17 = vector.broadcast %cst_12 : f32 to vector<8x128xf32>
    %18 = arith.cmpf ogt, %16, %17 : vector<8x128xf32>
    %cst_13 = arith.constant 0.00999999977 : f32
    %19 = vector.broadcast %cst_13 : f32 to vector<8x128xf32>
    %20 = arith.mulf %19, %16 : vector<8x128xf32>
    %21 = arith.select %18, %16, %20 : vector<8x128xi1>, vector<8x128xf32>
    %22 = arith.truncf %21 : vector<8x128xf32> to vector<8x128xbf16>
    %c0_14 = arith.constant 0 : index
    %c0_15 = arith.constant 0 : index
    %23 = vector.load %arg6[%c0_14, %c0_15] : memref<128x256xbf16, #tpu.memory_space<vmem>>, vector<128x256xbf16>
    %cst_16 = arith.constant dense<0.000000e+00> : vector<8x256xf32>
    %24 = tpu.matmul %22, %23, %cst_16 {dimension_numbers = #tpu.dot_dimension_numbers<[1], [0], [0], [1], [0, 0, 1, 1], [], []>} : vector<8x128xbf16>, vector<128x256xbf16>, vector<8x256xf32> -> vector<8x256xf32>
    %c0_17 = arith.constant 0 : index
    %c0_18 = arith.constant 0 : index
    %25 = vector.load %arg7[%c0_17, %c0_18] : memref<1x256xf32, #tpu.memory_space<vmem>>, vector<1x256xf32>
    %26 = vector.broadcast %25 : vector<1x256xf32> to vector<8x256xf32>
    %27 = arith.addf %24, %26 : vector<8x256xf32>
    %28 = vector.extract_strided_slice %27 {offsets = [0, 0], sizes = [8, 128], strides = [1, 1]} : vector<8x256xf32> to vector<8x128xf32>
    %29 = vector.extract_strided_slice %27 {offsets = [0, 128], sizes = [8, 128], strides = [1, 1]} : vector<8x256xf32> to vector<8x128xf32>
    %c0_19 = arith.constant 0 : index
    %c0_20 = arith.constant 0 : index
    %30 = vector.load %arg8[%c0_19, %c0_20] : memref<1x128xf32, #tpu.memory_space<vmem>>, vector<1x128xf32>
    %c0_21 = arith.constant 0 : index
    %c0_22 = arith.constant 0 : index
    %31 = vector.load %arg9[%c0_21, %c0_22] : memref<1x128xf32, #tpu.memory_space<vmem>>, vector<1x128xf32>
    %32 = vector.broadcast %30 : vector<1x128xf32> to vector<8x128xf32>
    %33 = arith.subf %32, %29 : vector<8x128xf32>
    %cst_23 = arith.constant 0.000000e+00 : f32
    %34 = vector.broadcast %cst_23 : f32 to vector<8x128xf32>
    %35 = arith.maximumf %33, %34 : vector<8x128xf32>
    %36 = math.absf %33 : vector<8x128xf32>
    %cst_24 = arith.constant 0.000000e+00 : f32
    %37 = vector.broadcast %cst_24 : f32 to vector<8x128xf32>
    %38 = arith.subf %37, %36 : vector<8x128xf32>
    %39 = math.exp %38 : vector<8x128xf32>
    %40 = math.log1p %39 : vector<8x128xf32>
    %41 = arith.addf %35, %40 : vector<8x128xf32>
    %42 = vector.broadcast %30 : vector<1x128xf32> to vector<8x128xf32>
    %43 = arith.subf %42, %41 : vector<8x128xf32>
    %44 = vector.broadcast %31 : vector<1x128xf32> to vector<8x128xf32>
    %45 = arith.subf %43, %44 : vector<8x128xf32>
    %cst_25 = arith.constant 0.000000e+00 : f32
    %46 = vector.broadcast %cst_25 : f32 to vector<8x128xf32>
    %47 = arith.maximumf %45, %46 : vector<8x128xf32>
    %48 = math.absf %45 : vector<8x128xf32>
    %cst_26 = arith.constant 0.000000e+00 : f32
    %49 = vector.broadcast %cst_26 : f32 to vector<8x128xf32>
    %50 = arith.subf %49, %48 : vector<8x128xf32>
    %51 = math.exp %50 : vector<8x128xf32>
    %52 = math.log1p %51 : vector<8x128xf32>
    %53 = arith.addf %47, %52 : vector<8x128xf32>
    %54 = vector.broadcast %31 : vector<1x128xf32> to vector<8x128xf32>
    %55 = arith.addf %54, %53 : vector<8x128xf32>
    %c0_27 = arith.constant 0 : index
    %c0_28 = arith.constant 0 : index
    %56 = vector.load %arg10[%c0_27, %c0_28] : memref<8x128xf32, #tpu.memory_space<vmem>>, vector<8x128xf32>
    tpu.vector_store %arg10[%c0_27, %c0_28], %28 {strides = array<i32>} : memref<8x128xf32, #tpu.memory_space<vmem>>, vector<8x128xf32>,
    %c0_29 = arith.constant 0 : index
    %c0_30 = arith.constant 0 : index
    %57 = vector.load %arg11[%c0_29, %c0_30] : memref<8x128xf32, #tpu.memory_space<vmem>>, vector<8x128xf32>
    tpu.vector_store %arg11[%c0_29, %c0_30], %55 {strides = array<i32>} : memref<8x128xf32, #tpu.memory_space<vmem>>, vector<8x128xf32>,
    return
  }
  func.func @transform_0(%arg0: i32) -> (i32, i32) {
    %c0_i32 = arith.constant 0 : i32
    %c0_i32_0 = arith.constant 0 : i32
    return %arg0, %c0_i32 : i32, i32
  }
  func.func @transform_1(%arg0: i32) -> (i32, i32) {
    %c0_i32 = arith.constant 0 : i32
    %c0_i32_0 = arith.constant 0 : i32
    %c0_i32_1 = arith.constant 0 : i32
    return %c0_i32, %c0_i32_0 : i32, i32
  }
  func.func @transform_2(%arg0: i32) -> (i32, i32) {
    %c0_i32 = arith.constant 0 : i32
    %c0_i32_0 = arith.constant 0 : i32
    %c0_i32_1 = arith.constant 0 : i32
    return %c0_i32, %c0_i32_0 : i32, i32
  }
  func.func @transform_3(%arg0: i32) -> (i32, i32) {
    %c0_i32 = arith.constant 0 : i32
    %c0_i32_0 = arith.constant 0 : i32
    %c0_i32_1 = arith.constant 0 : i32
    return %c0_i32, %c0_i32_0 : i32, i32
  }
  func.func @transform_4(%arg0: i32) -> (i32, i32) {
    %c0_i32 = arith.constant 0 : i32
    %c0_i32_0 = arith.constant 0 : i32
    %c0_i32_1 = arith.constant 0 : i32
    return %c0_i32, %c0_i32_0 : i32, i32
  }
  func.func @transform_5(%arg0: i32) -> (i32, i32) {
    %c0_i32 = arith.constant 0 : i32
    %c0_i32_0 = arith.constant 0 : i32
    %c0_i32_1 = arith.constant 0 : i32
    return %c0_i32, %c0_i32_0 : i32, i32
  }
  func.func @transform_6(%arg0: i32) -> (i32, i32) {
    %c0_i32 = arith.constant 0 : i32
    %c0_i32_0 = arith.constant 0 : i32
    %c0_i32_1 = arith.constant 0 : i32
    return %c0_i32, %c0_i32_0 : i32, i32
  }
  func.func @transform_7(%arg0: i32) -> (i32, i32) {
    %c0_i32 = arith.constant 0 : i32
    %c0_i32_0 = arith.constant 0 : i32
    %c0_i32_1 = arith.constant 0 : i32
    return %c0_i32, %c0_i32_0 : i32, i32
  }
  func.func @transform_8(%arg0: i32) -> (i32, i32) {
    %c0_i32 = arith.constant 0 : i32
    %c0_i32_0 = arith.constant 0 : i32
    %c0_i32_1 = arith.constant 0 : i32
    return %c0_i32, %c0_i32_0 : i32, i32
  }
  func.func @transform_9(%arg0: i32) -> (i32, i32) {
    %c0_i32 = arith.constant 0 : i32
    %c0_i32_0 = arith.constant 0 : i32
    return %arg0, %c0_i32 : i32, i32
  }
  func.func @transform_10(%arg0: i32) -> (i32, i32) {
    %c0_i32 = arith.constant 0 : i32
    %c0_i32_0 = arith.constant 0 : i32
    return %arg0, %c0_i32 : i32, i32
  }
}

</mosaic_0001>

<llo_original>
// kernel: tpu_custom_call.1
$region0: #{tpu_custom_call.1}
  #allocation0 [shape = 'u32[]', space=smem, size = 0x4, offset = 0x4, fixed_abs, tag = 'smem constant byte address 0x4 - core index']
  #allocation1 [shape = 'u32[144,128]{1,0:T(1,128)}', space=vmem, size = 0x12000, scoped, tag = 'internal scratch']
  %s0 = inlined_call_operand.hbm [shape: bf16[8,128], index: 0, kind: input, shape index: {}]
  %s1 = inlined_call_operand.hbm [shape: bf16[128,128], index: 1, kind: input, shape index: {}]
  %s2 = inlined_call_operand.vmem [shape: f32[1,128], index: 2, kind: input, shape index: {}]
  %s3 = inlined_call_operand.hbm [shape: bf16[128,128], index: 3, kind: input, shape index: {}]
  %s4 = inlined_call_operand.vmem [shape: f32[1,128], index: 4, kind: input, shape index: {}]
  %s5 = inlined_call_operand.hbm [shape: bf16[128,256], index: 5, kind: input, shape index: {}]
  %s6 = inlined_call_operand.vmem [shape: f32[1,256], index: 6, kind: input, shape index: {}]
  %s7 = inlined_call_operand.vmem [shape: f32[1,128], index: 7, kind: input, shape index: {}]
  %s8 = inlined_call_operand.vmem [shape: f32[1,128], index: 8, kind: input, shape index: {}]
  %s9 = inlined_call_operand.hbm [shape: f32[8,128], index: 9, kind: output, shape index: {0}]
  %s10 = inlined_call_operand.hbm [shape: f32[8,128], index: 10, kind: output, shape index: {1}]
  %11 = xla_tuple %s9, %s10
  %s12 = sld [smem:[#allocation0]]
  $region70: #{tpu_custom_call.1} parent=0
    _
  %s14 = ssub.s32 1, %s12
  %s15 = scalar_select 0, %s14, %s12
  $region1: #{tpu_custom_call.1} parent=0
    #allocation2 [shape = 'u8[2048]{0}', space=vmem, size = 0x800, scoped, tag = 'input window, operand 0, single buffered']
    #allocation3 [shape = 's32[1]{0}', space=sflag, size = 0x4, scoped, tag = 'scoped memory for tpu_custom_call.1']
    #allocation4 [shape = 's32[1]{0}', space=sflag, size = 0x4, scoped, tag = 'scoped memory for tpu_custom_call.1']
    #allocation5 [shape = 'u8[32768]{0}', space=vmem, size = 0x8000, scoped, tag = 'input window, operand 1, single buffered']
    #allocation6 [shape = 's32[1]{0}', space=sflag, size = 0x4, scoped, tag = 'scoped memory for tpu_custom_call.1']
    #allocation7 [shape = 'u8[32768]{0}', space=vmem, size = 0x8000, scoped, tag = 'input window, operand 3, single buffered']
    #allocation8 [shape = 'u8[65536]{0}', space=vmem, size = 0x10000, scoped, tag = 'input window, operand 5, single buffered']
    #allocation9 [shape = 's32[1]{0}', space=sflag, size = 0x4, scoped, tag = 'scoped memory for tpu_custom_call.1']
    #allocation10 [shape = 'u8[4096]{0}', space=vmem, size = 0x1000, scoped, tag = 'output window, operand 0, single buffered']
    #allocation11 [shape = 'u8[4096]{0}', space=vmem, size = 0x1000, scoped, tag = 'output window, operand 1, single buffered']
    #allocation12 [shape = 's32[1]{0}', space=sflag, size = 0x4, scoped, tag = 'scoped memory for tpu_custom_call.1']
    %16 = vsyncpa [#allocation3], 0
    %17 = vsyncpa [#allocation6], 0
    %18 = vsyncpa [#allocation9], 0
    %19 = vsyncpa [#allocation4], 0
    %20 = vsyncpa [#allocation12], 0
    // Predicated region
    $region2: #{tpu_custom_call.1} parent=1 // pred_check
      _
    $region3: #{tpu_custom_call.1} parent=1 // pred_check_branch
      %22 = sbr.rel (0) target = $region5
    $region4: #{tpu_custom_call.1} parent=1 // pred_region
      %s24 = ssub.s32 64, 64
      %25 = vsyncadd [#allocation3], %s24
      %s27 = sshll.u32 [#allocation2], 4
      %s28 = int_to_ptr.vmem [resolvable:$true] %s27
      %30 = dma.hbm_to_vmem [thread:$0]  %s0, 64, %s28, [#allocation3]
    $region5: #{tpu_custom_call.1} parent=1 // pred_fallthru
      _
    // Predicated region
    $region6: #{tpu_custom_call.1} parent=1 // pred_check
      _
    $region7: #{tpu_custom_call.1} parent=1 // pred_check_branch
      %32 = sbr.rel (0) target = $region9
    $region8: #{tpu_custom_call.1} parent=1 // pred_region
      %s34 = ssub.s32 1024, 1024
      %35 = vsyncadd [#allocation6], %s34
      %s36 = sshll.u32 [#allocation5], 4
      %s37 = int_to_ptr.vmem [resolvable:$true] %s36
      %42 = dma.hbm_to_vmem [thread:$0]  %s1, 1024, %s37, [#allocation6], 64, 64, 4
    $region9: #{tpu_custom_call.1} parent=1 // pred_fallthru
      _
    // Predicated region
    $region10: #{tpu_custom_call.1} parent=1 // pred_check
      _
    $region11: #{tpu_custom_call.1} parent=1 // pred_check_branch
      %44 = sbr.rel (0) target = $region13
    $region12: #{tpu_custom_call.1} parent=1 // pred_region
      _
    $region13: #{tpu_custom_call.1} parent=1 // pred_fallthru
      _
    // Predicated region
    $region14: #{tpu_custom_call.1} parent=1 // pred_check
      _
    $region15: #{tpu_custom_call.1} parent=1 // pred_check_branch
      %46 = sbr.rel (0) target = $region17
    $region16: #{tpu_custom_call.1} parent=1 // pred_region
      %s48 = ssub.s32 1024, 1024
      %49 = vsyncadd [#allocation6], %s48
      %s50 = sshll.u32 [#allocation7], 4
      %s51 = int_to_ptr.vmem [resolvable:$true] %s50
      %56 = dma.hbm_to_vmem [thread:$0]  %s3, 1024, %s51, [#allocation6], 64, 64, 4
    $region17: #{tpu_custom_call.1} parent=1 // pred_fallthru
      _
    // Predicated region
    $region18: #{tpu_custom_call.1} parent=1 // pred_check
      _
    $region19: #{tpu_custom_call.1} parent=1 // pred_check_branch
      %58 = sbr.rel (0) target = $region21
    $region20: #{tpu_custom_call.1} parent=1 // pred_region
      _
    $region21: #{tpu_custom_call.1} parent=1 // pred_fallthru
      _
    // Predicated region
    $region22: #{tpu_custom_call.1} parent=1 // pred_check
      _
    $region23: #{tpu_custom_call.1} parent=1 // pred_check_branch
      %60 = sbr.rel (0) target = $region25
    $region24: #{tpu_custom_call.1} parent=1 // pred_region
      %s62 = ssub.s32 2048, 2048
      %63 = vsyncadd [#allocation9], %s62
      %s64 = sshll.u32 [#allocation8], 4
      %s65 = int_to_ptr.vmem [resolvable:$true] %s64
      %70 = dma.hbm_to_vmem [thread:$0]  %s5, 2048, %s65, [#allocation9], 128, 128, 8
    $region25: #{tpu_custom_call.1} parent=1 // pred_fallthru
      _
    // Predicated region
    $region26: #{tpu_custom_call.1} parent=1 // pred_check
      _
    $region27: #{tpu_custom_call.1} parent=1 // pred_check_branch
      %72 = sbr.rel (0) target = $region29
    $region28: #{tpu_custom_call.1} parent=1 // pred_region
      _
    $region29: #{tpu_custom_call.1} parent=1 // pred_fallthru
      _
    // Predicated region
    $region30: #{tpu_custom_call.1} parent=1 // pred_check
      _
    $region31: #{tpu_custom_call.1} parent=1 // pred_check_branch
      %74 = sbr.rel (0) target = $region33
    $region32: #{tpu_custom_call.1} parent=1 // pred_region
      _
    $region33: #{tpu_custom_call.1} parent=1 // pred_fallthru
      _
    // Predicated region
    $region34: #{tpu_custom_call.1} parent=1 // pred_check
      _
    $region35: #{tpu_custom_call.1} parent=1 // pred_check_branch
      %76 = sbr.rel (0) target = $region37
    $region36: #{tpu_custom_call.1} parent=1 // pred_region
      _
    $region37: #{tpu_custom_call.1} parent=1 // pred_fallthru
      _
    // Predicated region
    $region38: #{tpu_custom_call.1} parent=1 // pred_check
      _
    $region39: #{tpu_custom_call.1} parent=1 // pred_check_branch
      %78 = sbr.rel (0) target = $region41
    $region40: #{tpu_custom_call.1} parent=1 // pred_region
      %79 = dma.done [#allocation3], 64
    $region41: #{tpu_custom_call.1} parent=1 // pred_fallthru
      _
    // Predicated region
    $region42: #{tpu_custom_call.1} parent=1 // pred_check
      _
    $region43: #{tpu_custom_call.1} parent=1 // pred_check_branch
      %81 = sbr.rel (0) target = $region45
    $region44: #{tpu_custom_call.1} parent=1 // pred_region
      %82 = dma.done [#allocation6], 1024
    $region45: #{tpu_custom_call.1} parent=1 // pred_fallthru
      _
    // Predicated region
    $region46: #{tpu_custom_call.1} parent=1 // pred_check
      _
    $region47: #{tpu_custom_call.1} parent=1 // pred_check_branch
      %84 = sbr.rel (0) target = $region49
    $region48: #{tpu_custom_call.1} parent=1 // pred_region
      %85 = dma.done [#allocation6], 1024
    $region49: #{tpu_custom_call.1} parent=1 // pred_fallthru
      _
    // Predicated region
    $region50: #{tpu_custom_call.1} parent=1 // pred_check
      _
    $region51: #{tpu_custom_call.1} parent=1 // pred_check_branch
      %87 = sbr.rel (0) target = $region53
    $region52: #{tpu_custom_call.1} parent=1 // pred_region
      %88 = dma.done [#allocation9], 2048
    $region53: #{tpu_custom_call.1} parent=1 // pred_fallthru
      _
    %v90 = vld [vmem:[#allocation2] sm:$0xf]
    %v91 = vld [vmem:[#allocation5] sm:$0xf]
    %v92 = vld [vmem:[#allocation5 + $0x4] sm:$0xf]
    %v93 = vld [vmem:[#allocation5 + $0x8] sm:$0xf]
    %v94 = vld [vmem:[#allocation5 + $0xc] sm:$0xf]
    %v95 = vld [vmem:[#allocation5 + $0x10] sm:$0xf]
    %v96 = vld [vmem:[#allocation5 + $0x14] sm:$0xf]
    %v97 = vld [vmem:[#allocation5 + $0x18] sm:$0xf]
    %v98 = vld [vmem:[#allocation5 + $0x1c] sm:$0xf]
    %v99 = vld [vmem:[#allocation5 + $0x20] sm:$0xf]
    %v100 = vld [vmem:[#allocation5 + $0x24] sm:$0xf]
    %v101 = vld [vmem:[#allocation5 + $0x28] sm:$0xf]
    %v102 = vld [vmem:[#allocation5 + $0x2c] sm:$0xf]
    %v103 = vld [vmem:[#allocation5 + $0x30] sm:$0xf]
    %v104 = vld [vmem:[#allocation5 + $0x34] sm:$0xf]
    %v105 = vld [vmem:[#allocation5 + $0x38] sm:$0xf]
    %v106 = vld [vmem:[#allocation5 + $0x3c] sm:$0xf]
    %v107 = vld [vmem:[%s2] sm:$0x1]
    %v109 = vlaneseq
    %v110 = vshrl.u32 %v109, 7
    %v111 = vsub.s32 0, %v110
    %v112 = vrot.slane %v107, %v111
    %v130 = vunpack.c.l.b16 %v91
    %v131 = vunpack.c.l.b16 %v92
    %v132 = vunpack.c.l.b16 %v93
    %v133 = vunpack.c.l.b16 %v94
    %v134 = vunpack.c.l.b16 %v95
    %v135 = vunpack.c.l.b16 %v96
    %v136 = vunpack.c.l.b16 %v97
    %v137 = vunpack.c.l.b16 %v98
    %v138 = vunpack.c.l.b16 %v99
    %v139 = vunpack.c.l.b16 %v100
    %v140 = vunpack.c.l.b16 %v101
    %v141 = vunpack.c.l.b16 %v102
    %v142 = vunpack.c.l.b16 %v103
    %v143 = vunpack.c.l.b16 %v104
    %v144 = vunpack.c.l.b16 %v105
    %v145 = vunpack.c.l.b16 %v106
    %v146 = vpack.c.b16 %v131, %v130
    %v147 = vpack.c.b16 %v133, %v132
    %v148 = vpack.c.b16 %v135, %v134
    %v149 = vpack.c.b16 %v137, %v136
    %v150 = vpack.c.b16 %v139, %v138
    %v151 = vpack.c.b16 %v141, %v140
    %v152 = vpack.c.b16 %v143, %v142
    %v153 = vpack.c.b16 %v145, %v144
    %162 = vmatprep.subr.bf16.mxu0 0
    %163 = vmatpush1.bf16.msra.mxu0 %v146
    %164 = vmatprep.subr.bf16.mxu0 0
    %165 = vmatpush1.bf16.msra.mxu0 %v147
    %166 = vmatprep.subr.bf16.mxu0 0
    %167 = vmatpush1.bf16.msra.mxu0 %v148
    %168 = vmatprep.subr.bf16.mxu0 0
    %169 = vmatpush1.bf16.msra.mxu0 %v149
    %170 = vmatprep.subr.bf16.mxu0 0
    %171 = vmatpush1.bf16.msra.mxu0 %v150
    %172 = vmatprep.subr.bf16.mxu0 0
    %173 = vmatpush1.bf16.msra.mxu0 %v151
    %174 = vmatprep.subr.bf16.mxu0 0
    %175 = vmatpush1.bf16.msra.mxu0 %v152
    %176 = vmatprep.subr.bf16.mxu0 0
    %177 = vmatpush1.bf16.msra.mxu0 %v153
    %178 = vmatprep.subr.bf16.mxu0 0
    %179 = vmatpush1.bf16.msra.mxu0 0
    %180 = vmatprep.subr.bf16.mxu0 0
    %181 = vmatpush1.bf16.msra.mxu0 0
    %182 = vmatprep.subr.bf16.mxu0 0
    %183 = vmatpush1.bf16.msra.mxu0 0
    %184 = vmatprep.subr.bf16.mxu0 0
    %185 = vmatpush1.bf16.msra.mxu0 0
    %186 = vmatprep.subr.bf16.mxu0 0
    %187 = vmatpush1.bf16.msra.mxu0 0
    %188 = vmatprep.subr.bf16.mxu0 0
    %189 = vmatpush1.bf16.msra.mxu0 0
    %190 = vmatprep.subr.bf16.mxu0 0
    %191 = vmatpush1.bf16.msra.mxu0 0
    %192 = vmatprep.subr.bf16.mxu0 0
    %193 = vmatpush1.bf16.msra.mxu0 0
    %194 = vmatprep.mubr.bf16.mxu0 0
    %195 = vmatmul.mubr.bf16.gmra.mrb[0].mxu0 %v90
    %v196 = vpop.f32.mrb[0].mxu0
    %v197 = vadd.f32 %v112, %v196
    %v198 = vpop.f32.mrb[0].mxu0
    %v199 = vpop.f32.mrb[0].mxu0
    %v200 = vpop.f32.mrb[0].mxu0
    %201 = vdwg.mxu0
    %vm202 = vcmp.gt.f32.partialorder %v197, 0.0
    %v203 = vmul.f32 %v197, 0.01
    %v204 = vsel %vm202, %v197, %v203
    %v205 = vpack.c.bf16 %v204, %v204
    %v206 = vld [vmem:[#allocation7] sm:$0xf]
    %v207 = vld [vmem:[#allocation7 + $0x4] sm:$0xf]
    %v208 = vld [vmem:[#allocation7 + $0x8] sm:$0xf]
    %v209 = vld [vmem:[#allocation7 + $0xc] sm:$0xf]
    %v210 = vld [vmem:[#allocation7 + $0x10] sm:$0xf]
    %v211 = vld [vmem:[#allocation7 + $0x14] sm:$0xf]
    %v212 = vld [vmem:[#allocation7 + $0x18] sm:$0xf]
    %v213 = vld [vmem:[#allocation7 + $0x1c] sm:$0xf]
    %v214 = vld [vmem:[#allocation7 + $0x20] sm:$0xf]
    %v215 = vld [vmem:[#allocation7 + $0x24] sm:$0xf]
    %v216 = vld [vmem:[#allocation7 + $0x28] sm:$0xf]
    %v217 = vld [vmem:[#allocation7 + $0x2c] sm:$0xf]
    %v218 = vld [vmem:[#allocation7 + $0x30] sm:$0xf]
    %v219 = vld [vmem:[#allocation7 + $0x34] sm:$0xf]
    %v220 = vld [vmem:[#allocation7 + $0x38] sm:$0xf]
    %v221 = vld [vmem:[#allocation7 + $0x3c] sm:$0xf]
    %v222 = vld [vmem:[%s4] sm:$0x1]
    %v224 = vlaneseq
    %v225 = vshrl.u32 %v224, 7
    %v226 = vsub.s32 0, %v225
    %v227 = vrot.slane %v222, %v226
    %v245 = vunpack.c.l.b16 %v206
    %v246 = vunpack.c.l.b16 %v207
    %v247 = vunpack.c.l.b16 %v208
    %v248 = vunpack.c.l.b16 %v209
    %v249 = vunpack.c.l.b16 %v210
    %v250 = vunpack.c.l.b16 %v211
    %v251 = vunpack.c.l.b16 %v212
    %v252 = vunpack.c.l.b16 %v213
    %v253 = vunpack.c.l.b16 %v214
    %v254 = vunpack.c.l.b16 %v215
    %v255 = vunpack.c.l.b16 %v216
    %v256 = vunpack.c.l.b16 %v217
    %v257 = vunpack.c.l.b16 %v218
    %v258 = vunpack.c.l.b16 %v219
    %v259 = vunpack.c.l.b16 %v220
    %v260 = vunpack.c.l.b16 %v221
    %v261 = vpack.c.b16 %v246, %v245
    %v262 = vpack.c.b16 %v248, %v247
    %v263 = vpack.c.b16 %v250, %v249
    %v264 = vpack.c.b16 %v252, %v251
    %v265 = vpack.c.b16 %v254, %v253
    %v266 = vpack.c.b16 %v256, %v255
    %v267 = vpack.c.b16 %v258, %v257
    %v268 = vpack.c.b16 %v260, %v259
    %277 = vmatprep.subr.bf16.mxu0 0
    %278 = vmatpush1.bf16.msra.mxu0 %v261
    %279 = vmatprep.subr.bf16.mxu0 0
    %280 = vmatpush1.bf16.msra.mxu0 %v262
    %281 = vmatprep.subr.bf16.mxu0 0
    %282 = vmatpush1.bf16.msra.mxu0 %v263
    %283 = vmatprep.subr.bf16.mxu0 0
    %284 = vmatpush1.bf16.msra.mxu0 %v264
    %285 = vmatprep.subr.bf16.mxu0 0
    %286 = vmatpush1.bf16.msra.mxu0 %v265
    %287 = vmatprep.subr.bf16.mxu0 0
    %288 = vmatpush1.bf16.msra.mxu0 %v266
    %289 = vmatprep.subr.bf16.mxu0 0
    %290 = vmatpush1.bf16.msra.mxu0 %v267
    %291 = vmatprep.subr.bf16.mxu0 0
    %292 = vmatpush1.bf16.msra.mxu0 %v268
    %293 = vmatprep.subr.bf16.mxu0 0
    %294 = vmatpush1.bf16.msra.mxu0 0
    %295 = vmatprep.subr.bf16.mxu0 0
    %296 = vmatpush1.bf16.msra.mxu0 0
    %297 = vmatprep.subr.bf16.mxu0 0
    %298 = vmatpush1.bf16.msra.mxu0 0
    %299 = vmatprep.subr.bf16.mxu0 0
    %300 = vmatpush1.bf16.msra.mxu0 0
    %301 = vmatprep.subr.bf16.mxu0 0
    %302 = vmatpush1.bf16.msra.mxu0 0
    %303 = vmatprep.subr.bf16.mxu0 0
    %304 = vmatpush1.bf16.msra.mxu0 0
    %305 = vmatprep.subr.bf16.mxu0 0
    %306 = vmatpush1.bf16.msra.mxu0 0
    %307 = vmatprep.subr.bf16.mxu0 0
    %308 = vmatpush1.bf16.msra.mxu0 0
    %309 = vmatprep.mubr.bf16.mxu0 0
    %310 = vmatmul.mubr.bf16.gmra.mrb[0].mxu0 %v205
    %v311 = vpop.f32.mrb[0].mxu0
    %v312 = vadd.f32 %v227, %v311
    %v313 = vpop.f32.mrb[0].mxu0
    %v314 = vpop.f32.mrb[0].mxu0
    %v315 = vpop.f32.mrb[0].mxu0
    %316 = vdwg.mxu0
    %vm317 = vcmp.gt.f32.partialorder %v312, 0.0
    %v318 = vmul.f32 %v312, 0.01
    %v319 = vsel %vm317, %v312, %v318
    %v320 = vpack.c.bf16 %v319, %v319
    %v321 = vld [vmem:[#allocation8] sm:$0xff]
    %v322 = vld [vmem:[#allocation8 + $0x8] sm:$0xff]
    %v323 = vld [vmem:[#allocation8 + $0x10] sm:$0xff]
    %v324 = vld [vmem:[#allocation8 + $0x18] sm:$0xff]
    %v325 = vld [vmem:[#allocation8 + $0x20] sm:$0xff]
    %v326 = vld [vmem:[#allocation8 + $0x28] sm:$0xff]
    %v327 = vld [vmem:[#allocation8 + $0x30] sm:$0xff]
    %v328 = vld [vmem:[#allocation8 + $0x38] sm:$0xff]
    %v329 = vld [vmem:[#allocation8 + $0x40] sm:$0xff]
    %v330 = vld [vmem:[#allocation8 + $0x48] sm:$0xff]
    %v331 = vld [vmem:[#allocation8 + $0x50] sm:$0xff]
    %v332 = vld [vmem:[#allocation8 + $0x58] sm:$0xff]
    %v333 = vld [vmem:[#allocation8 + $0x60] sm:$0xff]
    %v334 = vld [vmem:[#allocation8 + $0x68] sm:$0xff]
    %v335 = vld [vmem:[#allocation8 + $0x70] sm:$0xff]
    %v336 = vld [vmem:[#allocation8 + $0x78] sm:$0xff]
    %v337 = vld [vmem:[%s6] sm:$0x3]
    %v339 = vlaneseq
    %v340 = vshrl.u32 %v339, 7
    %v341 = vsub.s32 0, %v340
    %v342 = vrot.slane %v337, %v341
    %v343 = vlaneseq
    %v344 = vshrl.u32 %v343, 7
    %v345 = vsub.s32 1, %v344
    %v346 = vrot.slane %v337, %v345
    %v365 = vunpack.c.l.b16 %v321
    %v366 = vunpack.c.h.b16 %v321
    %v367 = vunpack.c.l.b16 %v322
    %v368 = vunpack.c.h.b16 %v322
    %v369 = vunpack.c.l.b16 %v323
    %v370 = vunpack.c.h.b16 %v323
    %v371 = vunpack.c.l.b16 %v324
    %v372 = vunpack.c.h.b16 %v324
    %v373 = vunpack.c.l.b16 %v325
    %v374 = vunpack.c.h.b16 %v325
    %v375 = vunpack.c.l.b16 %v326
    %v376 = vunpack.c.h.b16 %v326
    %v377 = vunpack.c.l.b16 %v327
    %v378 = vunpack.c.h.b16 %v327
    %v379 = vunpack.c.l.b16 %v328
    %v380 = vunpack.c.h.b16 %v328
    %v381 = vunpack.c.l.b16 %v329
    %v382 = vunpack.c.h.b16 %v329
    %v383 = vunpack.c.l.b16 %v330
    %v384 = vunpack.c.h.b16 %v330
    %v385 = vunpack.c.l.b16 %v331
    %v386 = vunpack.c.h.b16 %v331
    %v387 = vunpack.c.l.b16 %v332
    %v388 = vunpack.c.h.b16 %v332
    %v389 = vunpack.c.l.b16 %v333
    %v390 = vunpack.c.h.b16 %v333
    %v391 = vunpack.c.l.b16 %v334
    %v392 = vunpack.c.h.b16 %v334
    %v393 = vunpack.c.l.b16 %v335
    %v394 = vunpack.c.h.b16 %v335
    %v395 = vunpack.c.l.b16 %v336
    %v396 = vunpack.c.h.b16 %v336
    %v397 = vpack.c.b16 %v367, %v365
    %v398 = vpack.c.b16 %v368, %v366
    %v399 = vpack.c.b16 %v371, %v369
    %v400 = vpack.c.b16 %v372, %v370
    %v401 = vpack.c.b16 %v375, %v373
    %v402 = vpack.c.b16 %v376, %v374
    %v403 = vpack.c.b16 %v379, %v377
    %v404 = vpack.c.b16 %v380, %v378
    %v405 = vpack.c.b16 %v383, %v381
    %v406 = vpack.c.b16 %v384, %v382
    %v407 = vpack.c.b16 %v387, %v385
    %v408 = vpack.c.b16 %v388, %v386
    %v409 = vpack.c.b16 %v391, %v389
    %v410 = vpack.c.b16 %v392, %v390
    %v411 = vpack.c.b16 %v395, %v393
    %v412 = vpack.c.b16 %v396, %v394
    %429 = vmatprep.subr.bf16.mxu0 %v398
    %430 = vmatpush1.bf16.msra.mxu0 %v397
    %431 = vmatprep.subr.bf16.mxu0 %v400
    %432 = vmatpush1.bf16.msra.mxu0 %v399
    %433 = vmatprep.subr.bf16.mxu0 %v402
    %434 = vmatpush1.bf16.msra.mxu0 %v401
    %435 = vmatprep.subr.bf16.mxu0 %v404
    %436 = vmatpush1.bf16.msra.mxu0 %v403
    %437 = vmatprep.subr.bf16.mxu0 %v406
    %438 = vmatpush1.bf16.msra.mxu0 %v405
    %439 = vmatprep.subr.bf16.mxu0 %v408
    %440 = vmatpush1.bf16.msra.mxu0 %v407
    %441 = vmatprep.subr.bf16.mxu0 %v410
    %442 = vmatpush1.bf16.msra.mxu0 %v409
    %443 = vmatprep.subr.bf16.mxu0 %v412
    %444 = vmatpush1.bf16.msra.mxu0 %v411
    %445 = vmatprep.subr.bf16.mxu0 0
    %446 = vmatpush1.bf16.msra.mxu0 0
    %447 = vmatprep.subr.bf16.mxu0 0
    %448 = vmatpush1.bf16.msra.mxu0 0
    %449 = vmatprep.subr.bf16.mxu0 0
    %450 = vmatpush1.bf16.msra.mxu0 0
    %451 = vmatprep.subr.bf16.mxu0 0
    %452 = vmatpush1.bf16.msra.mxu0 0
    %453 = vmatprep.subr.bf16.mxu0 0
    %454 = vmatpush1.bf16.msra.mxu0 0
    %455 = vmatprep.subr.bf16.mxu0 0
    %456 = vmatpush1.bf16.msra.mxu0 0
    %457 = vmatprep.subr.bf16.mxu0 0
    %458 = vmatpush1.bf16.msra.mxu0 0
    %459 = vmatprep.subr.bf16.mxu0 0
    %460 = vmatpush1.bf16.msra.mxu0 0
    %461 = vmatprep.mubr.bf16.mxu0 0
    %462 = vmatmul.mubr.bf16.gmra.mrb[0].mxu0 %v320
    %v463 = vpop.f32.mrb[0].mxu0
    %v464 = vadd.f32 %v342, %v463
    %v465 = vpop.f32.mrb[0].mxu0
    %v466 = vadd.f32 %v346, %v465
    %v467 = vpop.f32.mrb[0].mxu0
    %v468 = vpop.f32.mrb[0].mxu0
    %469 = vdwg.mxu0
    %v470 = vld [vmem:[%s7] sm:$0x1]
    %v471 = vld [vmem:[%s8] sm:$0x1]
    %v473 = vlaneseq
    %v474 = vshrl.u32 %v473, 7
    %v475 = vsub.s32 0, %v474
    %v476 = vrot.slane %v470, %v475
    %v478 = vsub.f32 %v476, %v466
    %v479 = vmax.f32 %v478, 0.0
    %v480 = vand.u32 2147483647, %v478
    %v481 = vsub.f32 0.0, %v480
    %v482 = vmul.f32 %v481, 1.442695
    %v483 = vpow.pop %v482
    %v484 = vadd.f32 %v483, 1.0
    %v485 = vlog2.pop %v484
    %v486 = vmul.f32 %v485, 0.6931472
    %v487 = vmul.f32 -0.5, %v483
    %v488 = vadd.f32 %v487, 1.0
    %v489 = vmul.f32 %v488, %v483
    %v490 = vand.u32 2147483647, %v483
    %vm491 = vcmp.lt.f32.partialorder %v490, 0.0004427343
    %v492 = vsel %vm491, %v489, %v486
    %v493 = vadd.f32 %v479, %v492
    %v494 = vsub.f32 %v476, %v493
    %v496 = vlaneseq
    %v497 = vshrl.u32 %v496, 7
    %v498 = vsub.s32 0, %v497
    %v499 = vrot.slane %v471, %v498
    %v501 = vsub.f32 %v494, %v499
    %v502 = vmax.f32 %v501, 0.0
    %v503 = vand.u32 2147483647, %v501
    %v504 = vsub.f32 0.0, %v503
    %v505 = vmul.f32 %v504, 1.442695
    %v506 = vpow.pop %v505
    %v507 = vadd.f32 %v506, 1.0
    %v508 = vlog2.pop %v507
    %v509 = vmul.f32 %v508, 0.6931472
    %v510 = vmul.f32 -0.5, %v506
    %v511 = vadd.f32 %v510, 1.0
    %v512 = vmul.f32 %v511, %v506
    %v513 = vand.u32 2147483647, %v506
    %vm514 = vcmp.lt.f32.partialorder %v513, 0.0004427343
    %v515 = vsel %vm514, %v512, %v509
    %v516 = vadd.f32 %v502, %v515
    %v517 = vadd.f32 %v499, %v516
    %518 = vst [vmem:[#allocation10] sm:$0xff] %v464
    %519 = vst [vmem:[#allocation11] sm:$0xff] %v517
    // Predicated region
    $region54: #{tpu_custom_call.1} parent=1 // pred_check
      _
    $region55: #{tpu_custom_call.1} parent=1 // pred_check_branch
      %521 = sbr.rel (0) target = $region57
    $region56: #{tpu_custom_call.1} parent=1 // pred_region
      %s523 = ssub.s32 128, 128
      %524 = vsyncadd [#allocation4], %s523
      %s526 = sshll.u32 [#allocation10], 4
      %s527 = int_to_ptr.vmem [resolvable:$true] %s526
      %529 = dma.vmem_to_hbm [thread:$0]  %s527, 128, %s9, [#allocation4]
    $region57: #{tpu_custom_call.1} parent=1 // pred_fallthru
      _
    // Predicated region
    $region58: #{tpu_custom_call.1} parent=1 // pred_check
      _
    $region59: #{tpu_custom_call.1} parent=1 // pred_check_branch
      %531 = sbr.rel (0) target = $region61
    $region60: #{tpu_custom_call.1} parent=1 // pred_region
      %s533 = ssub.s32 128, 128
      %534 = vsyncadd [#allocation12], %s533
      %s536 = sshll.u32 [#allocation11], 4
      %s537 = int_to_ptr.vmem [resolvable:$true] %s536
      %539 = dma.vmem_to_hbm [thread:$0]  %s537, 128, %s10, [#allocation12]
    $region61: #{tpu_custom_call.1} parent=1 // pred_fallthru
      _
    // Predicated region
    $region62: #{tpu_custom_call.1} parent=1 // pred_check
      _
    $region63: #{tpu_custom_call.1} parent=1 // pred_check_branch
      %541 = sbr.rel (0) target = $region65
    $region64: #{tpu_custom_call.1} parent=1 // pred_region
      %542 = dma.done [#allocation4], 128
    $region65: #{tpu_custom_call.1} parent=1 // pred_fallthru
      _
    // Predicated region
    $region66: #{tpu_custom_call.1} parent=1 // pred_check
      _
    $region67: #{tpu_custom_call.1} parent=1 // pred_check_branch
      %544 = sbr.rel (0) target = $region69
    $region68: #{tpu_custom_call.1} parent=1 // pred_region
      %545 = dma.done [#allocation12], 128
    $region69: #{tpu_custom_call.1} parent=1 // pred_fallthru
      _
    %546 = vsyncpa [#allocation3], 1
    %547 = vsyncpa [#allocation6], 1
    %548 = vsyncpa [#allocation9], 1
    %549 = vsyncpa [#allocation4], 1
    %550 = vsyncpa [#allocation12], 1

</llo_original>
